<compile_context>
chip_gen: v6e
topology: v6e:2x2x1
jax: 0.10.0
libtpu: 0.0.40
codegen_flags: <defaults>
</compile_context>

<pallas_src>
from functools import partial

import jax
import jax.numpy as jnp
from jax.experimental import pallas as pl
from jax.experimental.pallas import tpu as pltpu


def _add_pos_kernel(x_ref, pos_ref, o_ref):
    """Elementwise add of the positional-embedding tile onto the token tile."""
    # x_ref: (1, tt, D), pos_ref: (1, tt, D) -- same block for every batch index.
    o_ref[...] = x_ref[...] + pos_ref[...]


@partial(jax.jit, static_argnames=("tt",))
def learnable_pos_encoding_pallas(x, pos_emb, *, tt=256):
    """x: (B, T, D) tokens; pos_emb: (1, max_len, D) learned parameter.

    Returns x + pos_emb[:, :T, :], shape (B, T, D).
    """
    B, T, D = x.shape
    assert pos_emb.shape[0] == 1 and pos_emb.shape[2] == D
    assert T <= pos_emb.shape[1], "sequence longer than max_len"

    # Static slice of the learned parameter to the active sequence length.
    pos = pos_emb[:, :T, :]

    # Sequence tile: as large as practical, sublane-aligned (multiple of 8) when
    # it does not cover the full sequence. Pallas masks the ragged last tile.
    if T <= tt:
        tt = T
    else:
        tt = max(8, (tt // 8) * 8)
    grid = (B, pl.cdiv(T, tt))

    itemsize = jnp.dtype(x.dtype).itemsize
    cost = pl.CostEstimate(
        flops=B * T * D,                                   # one add per element
        transcendentals=0,
        bytes_accessed=(2 * B * T * D + T * D) * itemsize,  # x in, y out, pos in
    )

    out = pl.pallas_call(
        _add_pos_kernel,
        out_shape=jax.ShapeDtypeStruct((B, T, D), x.dtype),
        grid_spec=pltpu.PrefetchScalarGridSpec(
            num_scalar_prefetch=0,
            grid=grid,
            in_specs=[
                # token tile: one batch row, tt sequence rows, full model dim
                pl.BlockSpec((1, tt, D), lambda b, t: (b, t, 0)),
                # positional tile: batch index ignored -> reused across batch
                pl.BlockSpec((1, tt, D), lambda b, t: (0, t, 0)),
            ],
            out_specs=pl.BlockSpec((1, tt, D), lambda b, t: (b, t, 0)),
        ),
        compiler_params=pltpu.CompilerParams(
            dimension_semantics=("parallel", "parallel"),
            vmem_limit_bytes=32 * 1024 * 1024,
        ),
        cost_estimate=cost,
    )(x, pos)

    return out


def learnable_pos_encoding_reference(x, pos_emb):
    """Pure-JAX reference matching the PyTorch forward."""
    T = x.shape[1]
    return x + pos_emb[:, :T, :]


if __name__ == "__main__":
    # Small shapes consistent with the module: batch=2, seq=8, d_model=32, max_len=200.
    B, T, D, MAX_LEN = 2, 8, 32, 200

    key = jax.random.PRNGKey(0)
    kx, kp = jax.random.split(key, 2)

    x = jax.random.normal(kx, (B, T, D), dtype=jnp.float32)
    # PyTorch initializes the parameter to zeros; use random values here so the
    # add is actually exercised (as it would be after training).
    pos_emb = 0.02 * jax.random.normal(kp, (1, MAX_LEN, D), dtype=jnp.float32)

    out = learnable_pos_encoding_pallas(x, pos_emb)
    out = jax.block_until_ready(out)

    ref = learnable_pos_encoding_reference(x, pos_emb)
    assert out.shape == (B, T, D)
    assert jnp.allclose(out, ref, atol=1e-6, rtol=1e-6), "mismatch vs reference"

    print("KERNEL_OK")
</pallas_src>

<mosaic_0001>
module attributes {stable_mosaic.version = 11 : i64} {
  func.func @_add_pos_kernel(%arg0: i32, %arg1: i32, %arg2: memref<1x8x32xf32, #tpu.memory_space<vmem>>, %arg3: memref<1x8x32xf32, #tpu.memory_space<vmem>>, %arg4: memref<1x8x32xf32, #tpu.memory_space<vmem>>) attributes {dimension_semantics = [#tpu.dimension_semantics<parallel>, #tpu.dimension_semantics<parallel>], iteration_bounds = array<i64: 2, 1>, scalar_prefetch = 0 : i64, scratch_operands = 0 : i64, tpu.core_type = #tpu.core_type<tc>, window_params = [{transform_indices = @transform_0, window_bounds = array<i64: 1, 8, 32>}, {transform_indices = @transform_1, window_bounds = array<i64: 1, 8, 32>}, {transform_indices = @transform_2, window_bounds = array<i64: 1, 8, 32>}]} {
    %c0 = arith.constant 0 : index
    %c0_0 = arith.constant 0 : index
    %c0_1 = arith.constant 0 : index
    %0 = vector.load %arg2[%c0, %c0_0, %c0_1] : memref<1x8x32xf32, #tpu.memory_space<vmem>>, vector<1x8x32xf32>
    %c0_2 = arith.constant 0 : index
    %c0_3 = arith.constant 0 : index
    %c0_4 = arith.constant 0 : index
    %1 = vector.load %arg3[%c0_2, %c0_3, %c0_4] : memref<1x8x32xf32, #tpu.memory_space<vmem>>, vector<1x8x32xf32>
    %2 = arith.addf %0, %1 : vector<1x8x32xf32>
    %c0_5 = arith.constant 0 : index
    %c0_6 = arith.constant 0 : index
    %c0_7 = arith.constant 0 : index
    %3 = vector.load %arg4[%c0_5, %c0_6, %c0_7] : memref<1x8x32xf32, #tpu.memory_space<vmem>>, vector<1x8x32xf32>
    tpu.vector_store %arg4[%c0_5, %c0_6, %c0_7], %2 {strides = array<i32>} : memref<1x8x32xf32, #tpu.memory_space<vmem>>, vector<1x8x32xf32>,
    return
  }
  func.func @transform_0(%arg0: i32, %arg1: i32) -> (i32, i32, i32) {
    %c0_i32 = arith.constant 0 : i32
    %c0_i32_0 = arith.constant 0 : i32
    return %arg0, %arg1, %c0_i32 : i32, i32, i32
  }
  func.func @transform_1(%arg0: i32, %arg1: i32) -> (i32, i32, i32) {
    %c0_i32 = arith.constant 0 : i32
    %c0_i32_0 = arith.constant 0 : i32
    %c0_i32_1 = arith.constant 0 : i32
    return %c0_i32, %arg1, %c0_i32_0 : i32, i32, i32
  }
  func.func @transform_2(%arg0: i32, %arg1: i32) -> (i32, i32, i32) {
    %c0_i32 = arith.constant 0 : i32
    %c0_i32_0 = arith.constant 0 : i32
    return %arg0, %arg1, %c0_i32 : i32, i32, i32
  }
}

</mosaic_0001>

<llo_original>
// kernel: learnable_pos_encoding_pallas.1
$region0: #{learnable_pos_encoding_pallas.1}
  #allocation0 [shape = 'u32[]', space=smem, size = 0x4, offset = 0x4, fixed_abs, tag = 'smem constant byte address 0x4 - core index']
  #allocation1 [shape = 'u32[144,128]{1,0:T(1,128)}', space=vmem, size = 0x12000, scoped, tag = 'internal scratch']
  %s0 = inlined_call_operand.vmem [shape: f32[2,8,32], index: 0, kind: input, shape index: {}]
  %s1 = inlined_call_operand.vmem [shape: f32[1,8,32], index: 1, kind: input, shape index: {}]
  %s2 = inlined_call_operand.hbm [shape: f32[2,8,32], index: 2, kind: output, shape index: {}]
  %s3 = sld [smem:[#allocation0]]
  $region41: #{learnable_pos_encoding_pallas.1} parent=0
    _
  %s5 = ssub.s32 1, %s3
  %s6 = scalar_select 0, %s5, %s3
  $region1: #{learnable_pos_encoding_pallas.1} parent=0
    #allocation2 [shape = 'u8[8192]{0}', space=vmem, size = 0x2000, scoped, tag = 'output window, operand 0']
    #allocation3 [shape = 's32[2]{0}', space=sflag, size = 0x8, scoped, tag = 'scoped memory for learnable_pos_encoding_pallas.1']
    %7 = vsyncpa [#allocation3], 0
    %s8 = scalar_lea.sflag [#allocation3], 1
    %9 = vsyncpa %s8, 0
    loop: start=0, step=1, limit=4
    $region2: #{learnable_pos_encoding_pallas.1} parent=1 // loop_pre_header
      _
    $region3: #{learnable_pos_encoding_pallas.1} parent=1 // loop_header
      %s11 = sphi 0, %s15
      %p12 = scmp.ge.s32.totalorder %s11, 4
      %s18 = sphi 0, %s30
      %s19 = sphi 0, %s26
      %s20 = sphi 0, %s18
      %s21 = sphi 0, %s19
      %s22 = sphi 0, %s20
      %s23 = sphi 0, %s21
      %s35 = sphi 0, %s37
      %s38 = sphi 0, %s35
      %s39 = sphi 0, %s38
      %s55 = sphi 0, %s39
      %s61 = sphi 0, %s63
      %s64 = sphi 0, %s61
      %s65 = sphi 0, %s64
      %s81 = sphi 0, %s65
      %s89 = sphi 0, %s91
      %s92 = sphi 0, %s89
      %s93 = sphi 0, %s92
      %s109 = sphi 0, %s93
    $region4: #{learnable_pos_encoding_pallas.1} parent=1 // loop_header_branch
      %14 = sbr.rel (%p12) target = $region8
    $region5: #{learnable_pos_encoding_pallas.1} parent=1 // loop_body
      %s16 = ssub.s32 %s11, 1
      %s17 = ssub.s32 %s11, 2
      %s24 = sadd.s32 1, %s19
      %p25 = scmp.ge.s32.totalorder %s24, 1
      %s26 = scalar_select %p25, 0, %s24
      %s27 = sadd.s32 1, %s18
      %s28 = scalar_select %p25, %s27, %s18
      %p29 = scmp.ge.s32.totalorder %s28, 2
      %s30 = scalar_select %p29, 0, %s28
      %s31 = ssub.s32 %s18, %s30
      %s32 = ssub.s32 %s19, %s26
      %s33 = sor.u32 %s31, %s32
      %p34 = scmp.eq.s32.totalorder %s33, 0
      %s36 = sadd.s32 %s35, 1
      %s37 = scalar_select %p34, %s35, %s36
      %p40 = pneg %p34
      %p41 = scmp.eq.s32.totalorder %s11, 1
      %p42 = por %p40, %p41
      %p43 = scmp.ne.s32.totalorder %s35, %s38
      %p44 = scmp.eq.s32.totalorder %s11, 0
      %p45 = por %p43, %p44
      %p46 = scmp.ne.s32.totalorder %s35, %s38
      %p47 = scmp.eq.s32.totalorder %s16, 1
      %p48 = por %p46, %p47
      %p49 = scmp.ne.s32.totalorder %s38, %s39
      %p50 = scmp.eq.s32.totalorder %s16, 0
      %p51 = por %p49, %p50
      %p52 = scmp.ne.s32.totalorder %s38, %s39
      %p53 = scmp.eq.s32.totalorder %s17, 1
      %p54 = por %p52, %p53
      %p56 = scmp.ne.s32.totalorder %s39, %s55
      %p57 = scmp.eq.s32.totalorder %s17, 0
      %p58 = por %p56, %p57
      %s59 = ssub.s32 %s19, %s26
      %p60 = scmp.eq.s32.totalorder %s59, 0
      %s62 = sadd.s32 %s61, 1
      %s63 = scalar_select %p60, %s61, %s62
      %p66 = pneg %p60
      %p67 = scmp.eq.s32.totalorder %s11, 1
      %p68 = por %p66, %p67
      %p69 = scmp.ne.s32.totalorder %s61, %s64
      %p70 = scmp.eq.s32.totalorder %s11, 0
      %p71 = por %p69, %p70
      %p72 = scmp.ne.s32.totalorder %s61, %s64
      %p73 = scmp.eq.s32.totalorder %s16, 1
      %p74 = por %p72, %p73
      %p75 = scmp.ne.s32.totalorder %s64, %s65
      %p76 = scmp.eq.s32.totalorder %s16, 0
      %p77 = por %p75, %p76
      %p78 = scmp.ne.s32.totalorder %s64, %s65
      %p79 = scmp.eq.s32.totalorder %s17, 1
      %p80 = por %p78, %p79
      %p82 = scmp.ne.s32.totalorder %s65, %s81
      %p83 = scmp.eq.s32.totalorder %s17, 0
      %p84 = por %p82, %p83
      %s85 = ssub.s32 %s18, %s30
      %s86 = ssub.s32 %s19, %s26
      %s87 = sor.u32 %s85, %s86
      %p88 = scmp.eq.s32.totalorder %s87, 0
      %s90 = sadd.s32 %s89, 1
      %s91 = scalar_select %p88, %s89, %s90
      %p94 = pneg %p88
      %p95 = scmp.eq.s32.totalorder %s11, 1
      %p96 = por %p94, %p95
      %p97 = scmp.ne.s32.totalorder %s89, %s92
      %p98 = scmp.eq.s32.totalorder %s11, 0
      %p99 = por %p97, %p98
      %p100 = scmp.ne.s32.totalorder %s89, %s92
      %p101 = scmp.eq.s32.totalorder %s16, 1
      %p102 = por %p100, %p101
      %p103 = scmp.ne.s32.totalorder %s92, %s93
      %p104 = scmp.eq.s32.totalorder %s16, 0
      %p105 = por %p103, %p104
      %p106 = scmp.ne.s32.totalorder %s92, %s93
      %p107 = scmp.eq.s32.totalorder %s17, 1
      %p108 = por %p106, %p107
      %p110 = scmp.ne.s32.totalorder %s93, %s109
      %p111 = scmp.eq.s32.totalorder %s17, 0
      %p112 = por %p110, %p111
      %p113 = scmp.le.s32.totalorder 1, %s11
      %p114 = scmp.lt.s32.totalorder %s11, 3
      %p115 = pnand %p113, %p114
      %p116 = pneg %p115
      // Predicated region
      $region9: #{learnable_pos_encoding_pallas.1} parent=5 // pred_check
        _
      $region10: #{learnable_pos_encoding_pallas.1} parent=5 // pred_check_branch
        %118 = sbr.rel (%p115) target = $region12
      $region11: #{learnable_pos_encoding_pallas.1} parent=5 // pred_region
        %s119 = ssub.s32 %s11, 1
        // Predicated region
        $region13: #{learnable_pos_encoding_pallas.1} parent=11 // pred_check
          %p120 = pneg %p77
        $region14: #{learnable_pos_encoding_pallas.1} parent=11 // pred_check_branch
          %122 = sbr.rel (%p120) target = $region16
        $region15: #{learnable_pos_encoding_pallas.1} parent=11 // pred_region
          %p123 = scmp.lt.s32.totalorder %s21, 0
          %s124 = scalar_select %p123, %s21, 0
          %s125 = smul.addr %s124, 8
          %s126 = scalar_lea.vmem %s1, %s125
        $region16: #{learnable_pos_encoding_pallas.1} parent=11 // pred_fallthru
          _
      $region12: #{learnable_pos_encoding_pallas.1} parent=5 // pred_fallthru
        _
      %p127 = scmp.lt.s32.totalorder %s11, 2
      // Predicated region
      $region17: #{learnable_pos_encoding_pallas.1} parent=5 // pred_check
        %p128 = pneg %p127
      $region18: #{learnable_pos_encoding_pallas.1} parent=5 // pred_check_branch
        %130 = sbr.rel (%p128) target = $region20
      $region19: #{learnable_pos_encoding_pallas.1} parent=5 // pred_region
        // Predicated region
        $region21: #{learnable_pos_encoding_pallas.1} parent=19 // pred_check
          %p131 = pneg %p45
        $region22: #{learnable_pos_encoding_pallas.1} parent=19 // pred_check_branch
          %133 = sbr.rel (%p131) target = $region24
        $region23: #{learnable_pos_encoding_pallas.1} parent=19 // pred_region
          %p134 = scmp.lt.s32.totalorder %s18, 1
          %s135 = scalar_select %p134, %s18, 1
          %p136 = scmp.lt.s32.totalorder %s19, 0
          %s137 = scalar_select %p136, %s19, 0
          %s138 = sadd.s32 %s137, %s135
          %s139 = smul.addr %s138, 8
          %s140 = scalar_lea.vmem %s0, %s139
        $region24: #{learnable_pos_encoding_pallas.1} parent=19 // pred_fallthru
          _
      $region20: #{learnable_pos_encoding_pallas.1} parent=5 // pred_fallthru
        _
      %p141 = scmp.le.s32.totalorder 1, %s11
      %p142 = scmp.lt.s32.totalorder %s11, 3
      %p143 = pnand %p141, %p142
      %p144 = pneg %p143
      // Predicated region
      $region25: #{learnable_pos_encoding_pallas.1} parent=5 // pred_check
        _
      $region26: #{learnable_pos_encoding_pallas.1} parent=5 // pred_check_branch
        %146 = sbr.rel (%p143) target = $region28
      $region27: #{learnable_pos_encoding_pallas.1} parent=5 // pred_region
        %s147 = ssub.s32 %s11, 1
        %p148 = scmp.lt.s32.totalorder %s20, 1
        %s149 = scalar_select %p148, %s20, 1
        %p150 = scmp.lt.s32.totalorder %s21, 0
        %s151 = scalar_select %p150, %s21, 0
        %s152 = sadd.s32 %s151, %s149
        %s153 = smul.addr %s152, 8
        %s154 = scalar_lea.vmem %s0, %s153
        %p155 = pneg %p51
        %p156 = pneg %p48
        %p157 = scmp.lt.s32.totalorder %s21, 0
        %s158 = scalar_select %p157, %s21, 0
        %s159 = smul.addr %s158, 8
        %s160 = scalar_lea.vmem %s1, %s159
        %p161 = pneg %p77
        %p162 = pneg %p74
        %p163 = pneg %p105
        %p164 = pneg %p102
        %s165 = sand.u32 %s92, 1
        %s166 = scalar_lea.sflag [#allocation3], %s165
        %s167 = sand.u32 %s92, 1
        %s168 = smul.addr %s167, 8
        %s169 = scalar_lea.vmem [#allocation2], %s168
        %p170 = scmp.lt.s32.totalorder %s20, 1
        %s171 = scalar_select %p170, %s20, 1
        %p172 = scmp.lt.s32.totalorder %s21, 0
        %s173 = scalar_select %p172, %s21, 0
        %s174 = sadd.s32 %s173, %s171
        %s175 = smul.addr %s174, 8
        %s176 = scalar_lea.vmem %s0, %s175
        %p177 = scmp.lt.s32.totalorder %s21, 0
        %s178 = scalar_select %p177, %s21, 0
        %s179 = smul.addr %s178, 8
        %s180 = scalar_lea.vmem %s1, %s179
        %v181 = vld [vmem:[%s176] sm:$0xff]
        %v182 = vld [vmem:[%s180] sm:$0xff]
        %v183 = vadd.f32 %v181, %v182
        %vm184 = vcmask 261120
        %185 = vst.msk [vmem:[%s169] sm:$0xff] %vm184, %v183
        %s186 = sand.u32 %s92, 1
        %s187 = scalar_lea.sflag [#allocation3], %s186
        %s188 = sand.u32 %s92, 1
        %s189 = smul.addr %s188, 8
        %s190 = scalar_lea.vmem [#allocation2], %s189
        // Predicated region
        $region29: #{learnable_pos_encoding_pallas.1} parent=27 // pred_check
          %p191 = pneg %p102
        $region30: #{learnable_pos_encoding_pallas.1} parent=27 // pred_check_branch
          %193 = sbr.rel (%p191) target = $region32
        $region31: #{learnable_pos_encoding_pallas.1} parent=27 // pred_region
          %s195 = ssub.s32 128, 128
          %196 = vsyncadd %s187, %s195
          %s197 = sadd.s32 %s21, %s20
          %s198 = smul.addr %s197, 128
          %s199 = scalar_lea.hbm %s2, %s198
          %s201 = sshll.u32 %s190, 4
          %s202 = int_to_ptr.vmem [resolvable:$true] %s201
          %204 = dma.vmem_to_hbm [thread:$0]  %s202, 128, %s199, %s187
        $region32: #{learnable_pos_encoding_pallas.1} parent=27 // pred_fallthru
          _
      $region28: #{learnable_pos_encoding_pallas.1} parent=5 // pred_fallthru
        _
      %p205 = scmp.le.s32.totalorder 2, %s11
      // Predicated region
      $region33: #{learnable_pos_encoding_pallas.1} parent=5 // pred_check
        %p206 = pneg %p205
      $region34: #{learnable_pos_encoding_pallas.1} parent=5 // pred_check_branch
        %208 = sbr.rel (%p206) target = $region36
      $region35: #{learnable_pos_encoding_pallas.1} parent=5 // pred_region
        %s209 = ssub.s32 %s11, 2
        // Predicated region
        $region37: #{learnable_pos_encoding_pallas.1} parent=35 // pred_check
          %p210 = pneg %p108
        $region38: #{learnable_pos_encoding_pallas.1} parent=35 // pred_check_branch
          %212 = sbr.rel (%p210) target = $region40
        $region39: #{learnable_pos_encoding_pallas.1} parent=35 // pred_region
          %s213 = sand.u32 %s93, 1
          %s214 = scalar_lea.sflag [#allocation3], %s213
          %s215 = sand.u32 %s93, 1
          %s216 = smul.addr %s215, 8
          %s217 = scalar_lea.vmem [#allocation2], %s216
          %218 = dma.done %s214, 128
        $region40: #{learnable_pos_encoding_pallas.1} parent=35 // pred_fallthru
          _
      $region36: #{learnable_pos_encoding_pallas.1} parent=5 // pred_fallthru
        _
    $region6: #{learnable_pos_encoding_pallas.1} parent=1 // loop_footer
      %s15 = sadd.s32 1, %s11
    $region7: #{learnable_pos_encoding_pallas.1} parent=1 // loop_footer_branch
      %10 = sbr.rel target = $region3
    $region8: #{learnable_pos_encoding_pallas.1} parent=1 // loop_exit
      _
    %219 = vsyncpa [#allocation3], 1
    %s220 = scalar_lea.sflag [#allocation3], 1
    %221 = vsyncpa %s220, 1

</llo_original>
